<compile_context>
chip_gen: v7x
topology: tpu7x:2x2x1
jax: 0.10.0
libtpu: 0.0.40
codegen_flags: <defaults>
</compile_context>

<pallas_src>
import jax
import jax.numpy as jnp
from jax.experimental import pallas as pl
from jax.experimental.pallas import tpu as pltpu


def anglenet_kernel(xT_ref, w1_ref, b1_ref, w2_ref, b2_ref, w3_ref, b3_ref, o_ref):
    # Layer 1: (H1, D_in) @ (D_in, TB) -> (H1, TB), f32 accumulation on the MXU.
    h1 = jnp.dot(w1_ref[...], xT_ref[...], preferred_element_type=jnp.float32)
    h1 = jnp.maximum(h1 + b1_ref[...], 0.0)          # bias (H1, 1) broadcasts over lanes

    # Layer 2: (H2, H1) @ (H1, TB) -> (H2, TB)
    h2 = jnp.dot(w2_ref[...], h1.astype(w2_ref.dtype),
                 preferred_element_type=jnp.float32)
    h2 = jnp.maximum(h2 + b2_ref[...], 0.0)

    # Layer 3: (D_out, H2) @ (H2, TB) -> (D_out, TB), then sigmoid in f32.
    h3 = jnp.dot(w3_ref[...], h2.astype(w3_ref.dtype),
                 preferred_element_type=jnp.float32)
    h3 = h3 + b3_ref[...]
    o_ref[...] = jax.nn.sigmoid(h3).astype(o_ref.dtype)


def anglenet_forward(x, params, *, tb=None):
    """x: (B, input_dim) float32. params: dict of w1,b1,w2,b2,w3,b3 (w: (in, out))."""
    B, in_dim = x.shape
    h1_dim = params["w1"].shape[1]
    h2_dim = params["w2"].shape[1]
    out_dim = params["w3"].shape[1]

    # Batch tile: lane-dense (multiple of 128), capped so double-buffered tiles
    # fit v7x's 64 MiB VMEM with plenty of headroom (bf16 x-tile @ TB=4096 is ~tiny).
    if tb is None:
        tb = min(4096, pl.cdiv(B, 128) * 128)
    tb = max(128, (tb // 128) * 128)
    b_pad = pl.cdiv(B, tb) * tb
    grid = (b_pad // tb,)

    # Feature-major layout: batch on lanes. Pad ragged batch with zeros (padded
    # columns compute garbage that is sliced off below).
    xT = jnp.zeros((in_dim, b_pad), jnp.bfloat16).at[:, :B].set(
        x.T.astype(jnp.bfloat16))

    # Weights transposed once host-side to (out_features, in_features), bf16 for
    # half the DMA bytes; biases kept f32, shaped (out, 1) to broadcast over lanes.
    w1T = params["w1"].T.astype(jnp.bfloat16)
    w2T = params["w2"].T.astype(jnp.bfloat16)
    w3T = params["w3"].T.astype(jnp.bfloat16)
    b1c = params["b1"].reshape(-1, 1).astype(jnp.float32)
    b2c = params["b2"].reshape(-1, 1).astype(jnp.float32)
    b3c = params["b3"].reshape(-1, 1).astype(jnp.float32)

    # Constant index_map => weights/biases DMA'd once, resident across the grid.
    const = lambda arr: pl.BlockSpec(arr.shape, lambda i: (0,) * arr.ndim)

    flops = 2 * b_pad * (in_dim * h1_dim + h1_dim * h2_dim + h2_dim * out_dim)
    bytes_accessed = (xT.size * 2 + (w1T.size + w2T.size + w3T.size) * 2
                      + (b1c.size + b2c.size + b3c.size) * 4
                      + out_dim * b_pad * 4)

    oT = pl.pallas_call(
        anglenet_kernel,
        out_shape=jax.ShapeDtypeStruct((out_dim, b_pad), jnp.float32),
        grid=grid,
        in_specs=[
            pl.BlockSpec((in_dim, tb), lambda i: (0, i)),
            const(w1T), const(b1c),
            const(w2T), const(b2c),
            const(w3T), const(b3c),
        ],
        out_specs=pl.BlockSpec((out_dim, tb), lambda i: (0, i)),
        compiler_params=pltpu.CompilerParams(
            dimension_semantics=("parallel",)),
        cost_estimate=pl.CostEstimate(
            flops=flops,
            transcendentals=b_pad * out_dim,
            bytes_accessed=bytes_accessed),
    )(xT, w1T, b1c, w2T, b2c, w3T, b3c)

    # Back to the module's (B, out_dim) layout, dropping batch padding.
    return oT.T[:B, :]


def init_params(key, input_dim, hidden, output_dim):
    """Deterministic init mimicking torch.nn.Linear default (uniform +-1/sqrt(fan_in))."""
    ks = jax.random.split(key, 6)

    def lin(kw, kb, fan_in, fan_out):
        bound = 1.0 / jnp.sqrt(fan_in)
        w = jax.random.uniform(kw, (fan_in, fan_out), jnp.float32, -bound, bound)
        b = jax.random.uniform(kb, (fan_out,), jnp.float32, -bound, bound)
        return w, b

    w1, b1 = lin(ks[0], ks[1], input_dim, hidden[0])
    w2, b2 = lin(ks[2], ks[3], hidden[0], hidden[1])
    w3, b3 = lin(ks[4], ks[5], hidden[1], output_dim)
    return {"w1": w1, "b1": b1, "w2": w2, "b2": b2, "w3": w3, "b3": b3}


if __name__ == "__main__":
    key = jax.random.PRNGKey(0)
    k_in, k_par = jax.random.split(key)

    # Small shapes consistent with the module's forward: x is (batch, input_dim)
    B, input_dim, output_dim = 8, 16, 8
    hidden = (32, 32)

    x = jax.random.normal(k_in, (B, input_dim), dtype=jnp.float32)
    params = init_params(k_par, input_dim, hidden, output_dim)

    out = anglenet_forward(x, params)
    out = jax.block_until_ready(out)
    assert out.shape == (B, output_dim)

    # Reference 1: same math / same bf16 input-and-weight rounding as the kernel.
    def ref_bf16(x, p):
        xb = x.astype(jnp.bfloat16)
        h = jnp.maximum(jnp.dot(xb, p["w1"].astype(jnp.bfloat16),
                                preferred_element_type=jnp.float32) + p["b1"], 0.0)
        h = jnp.maximum(jnp.dot(h.astype(jnp.bfloat16), p["w2"].astype(jnp.bfloat16),
                                preferred_element_type=jnp.float32) + p["b2"], 0.0)
        h = jnp.dot(h.astype(jnp.bfloat16), p["w3"].astype(jnp.bfloat16),
                    preferred_element_type=jnp.float32) + p["b3"]
        return jax.nn.sigmoid(h)

    # Reference 2: pure f32 math of the PyTorch module.
    def ref_f32(x, p):
        h = jnp.maximum(x @ p["w1"] + p["b1"], 0.0)
        h = jnp.maximum(h @ p["w2"] + p["b2"], 0.0)
        return jax.nn.sigmoid(h @ p["w3"] + p["b3"])

    assert jnp.allclose(out, ref_bf16(x, params), atol=1e-4, rtol=1e-4), \
        "mismatch vs bf16-matched reference"
    assert jnp.allclose(out, ref_f32(x, params), atol=2e-2, rtol=2e-2), \
        "mismatch vs f32 reference"

    print("KERNEL_OK")
</pallas_src>

<mosaic_0001>
module attributes {stable_mosaic.version = 11 : i64} {
  func.func @anglenet_kernel(%arg0: i32, %arg1: memref<16x128xbf16, #tpu.memory_space<vmem>>, %arg2: memref<32x16xbf16, #tpu.memory_space<vmem>>, %arg3: memref<32x1xf32, #tpu.memory_space<vmem>>, %arg4: memref<32x32xbf16, #tpu.memory_space<vmem>>, %arg5: memref<32x1xf32, #tpu.memory_space<vmem>>, %arg6: memref<8x32xbf16, #tpu.memory_space<vmem>>, %arg7: memref<8x1xf32, #tpu.memory_space<vmem>>, %arg8: memref<8x128xf32, #tpu.memory_space<vmem>>) attributes {dimension_semantics = [#tpu.dimension_semantics<parallel>], iteration_bounds = array<i64: 1>, scalar_prefetch = 0 : i64, scratch_operands = 0 : i64, tpu.core_type = #tpu.core_type<tc>, window_params = [{transform_indices = @transform_0, window_bounds = array<i64: 16, 128>}, {pipeline_mode = #tpu.pipeline_mode<synchronous>, transform_indices = @transform_1, window_bounds = array<i64: 32, 16>}, {pipeline_mode = #tpu.pipeline_mode<synchronous>, transform_indices = @transform_2, window_bounds = array<i64: 32, 1>}, {pipeline_mode = #tpu.pipeline_mode<synchronous>, transform_indices = @transform_3, window_bounds = array<i64: 32, 32>}, {pipeline_mode = #tpu.pipeline_mode<synchronous>, transform_indices = @transform_4, window_bounds = array<i64: 32, 1>}, {pipeline_mode = #tpu.pipeline_mode<synchronous>, transform_indices = @transform_5, window_bounds = array<i64: 8, 32>}, {pipeline_mode = #tpu.pipeline_mode<synchronous>, transform_indices = @transform_6, window_bounds = array<i64: 8, 1>}, {transform_indices = @transform_7, window_bounds = array<i64: 8, 128>}]} {
    %c0 = arith.constant 0 : index
    %c0_0 = arith.constant 0 : index
    %0 = vector.load %arg2[%c0, %c0_0] : memref<32x16xbf16, #tpu.memory_space<vmem>>, vector<32x16xbf16>
    %c0_1 = arith.constant 0 : index
    %c0_2 = arith.constant 0 : index
    %1 = vector.load %arg1[%c0_1, %c0_2] : memref<16x128xbf16, #tpu.memory_space<vmem>>, vector<16x128xbf16>
    %cst = arith.constant dense<0.000000e+00> : vector<32x128xf32>
    %2 = tpu.matmul %0, %1, %cst {dimension_numbers = #tpu.dot_dimension_numbers<[1], [0], [0], [1], [0, 0, 1, 1], [], []>} : vector<32x16xbf16>, vector<16x128xbf16>, vector<32x128xf32> -> vector<32x128xf32>
    %c0_3 = arith.constant 0 : index
    %c0_4 = arith.constant 0 : index
    %3 = vector.load %arg3[%c0_3, %c0_4] : memref<32x1xf32, #tpu.memory_space<vmem>>, vector<32x1xf32>
    %4 = vector.broadcast %3 : vector<32x1xf32> to vector<32x128xf32>
    %5 = arith.addf %2, %4 : vector<32x128xf32>
    %cst_5 = arith.constant 0.000000e+00 : f32
    %6 = vector.broadcast %cst_5 : f32 to vector<32x128xf32>
    %7 = arith.maximumf %5, %6 : vector<32x128xf32>
    %c0_6 = arith.constant 0 : index
    %c0_7 = arith.constant 0 : index
    %8 = vector.load %arg4[%c0_6, %c0_7] : memref<32x32xbf16, #tpu.memory_space<vmem>>, vector<32x32xbf16>
    %9 = arith.truncf %7 : vector<32x128xf32> to vector<32x128xbf16>
    %cst_8 = arith.constant dense<0.000000e+00> : vector<32x128xf32>
    %10 = tpu.matmul %8, %9, %cst_8 {dimension_numbers = #tpu.dot_dimension_numbers<[1], [0], [0], [1], [0, 0, 1, 1], [], []>} : vector<32x32xbf16>, vector<32x128xbf16>, vector<32x128xf32> -> vector<32x128xf32>
    %c0_9 = arith.constant 0 : index
    %c0_10 = arith.constant 0 : index
    %11 = vector.load %arg5[%c0_9, %c0_10] : memref<32x1xf32, #tpu.memory_space<vmem>>, vector<32x1xf32>
    %12 = vector.broadcast %11 : vector<32x1xf32> to vector<32x128xf32>
    %13 = arith.addf %10, %12 : vector<32x128xf32>
    %cst_11 = arith.constant 0.000000e+00 : f32
    %14 = vector.broadcast %cst_11 : f32 to vector<32x128xf32>
    %15 = arith.maximumf %13, %14 : vector<32x128xf32>
    %c0_12 = arith.constant 0 : index
    %c0_13 = arith.constant 0 : index
    %16 = vector.load %arg6[%c0_12, %c0_13] : memref<8x32xbf16, #tpu.memory_space<vmem>>, vector<8x32xbf16>
    %17 = arith.truncf %15 : vector<32x128xf32> to vector<32x128xbf16>
    %cst_14 = arith.constant dense<0.000000e+00> : vector<8x128xf32>
    %18 = tpu.matmul %16, %17, %cst_14 {dimension_numbers = #tpu.dot_dimension_numbers<[1], [0], [0], [1], [0, 0, 1, 1], [], []>} : vector<8x32xbf16>, vector<32x128xbf16>, vector<8x128xf32> -> vector<8x128xf32>
    %c0_15 = arith.constant 0 : index
    %c0_16 = arith.constant 0 : index
    %19 = vector.load %arg7[%c0_15, %c0_16] : memref<8x1xf32, #tpu.memory_space<vmem>>, vector<8x1xf32>
    %20 = vector.broadcast %19 : vector<8x1xf32> to vector<8x128xf32>
    %21 = arith.addf %18, %20 : vector<8x128xf32>
    %22 = arith.negf %21 : vector<8x128xf32>
    %23 = math.exp %22 : vector<8x128xf32>
    %cst_17 = arith.constant 1.000000e+00 : f32
    %24 = vector.broadcast %cst_17 : f32 to vector<8x128xf32>
    %25 = arith.addf %24, %23 : vector<8x128xf32>
    %26 = arith.divf %24, %25 : vector<8x128xf32>
    %c0_18 = arith.constant 0 : index
    %c0_19 = arith.constant 0 : index
    %27 = vector.load %arg8[%c0_18, %c0_19] : memref<8x128xf32, #tpu.memory_space<vmem>>, vector<8x128xf32>
    tpu.vector_store %arg8[%c0_18, %c0_19], %26 {strides = array<i32>} : memref<8x128xf32, #tpu.memory_space<vmem>>, vector<8x128xf32>,
    return
  }
  func.func @transform_0(%arg0: i32) -> (i32, i32) {
    %c0_i32 = arith.constant 0 : i32
    %c0_i32_0 = arith.constant 0 : i32
    return %c0_i32, %arg0 : i32, i32
  }
  func.func @transform_1(%arg0: i32) -> (i32, i32) {
    %c0_i32 = arith.constant 0 : i32
    %c0_i32_0 = arith.constant 0 : i32
    %c0_i32_1 = arith.constant 0 : i32
    return %c0_i32, %c0_i32_0 : i32, i32
  }
  func.func @transform_2(%arg0: i32) -> (i32, i32) {
    %c0_i32 = arith.constant 0 : i32
    %c0_i32_0 = arith.constant 0 : i32
    %c0_i32_1 = arith.constant 0 : i32
    return %c0_i32, %c0_i32_0 : i32, i32
  }
  func.func @transform_3(%arg0: i32) -> (i32, i32) {
    %c0_i32 = arith.constant 0 : i32
    %c0_i32_0 = arith.constant 0 : i32
    %c0_i32_1 = arith.constant 0 : i32
    return %c0_i32, %c0_i32_0 : i32, i32
  }
  func.func @transform_4(%arg0: i32) -> (i32, i32) {
    %c0_i32 = arith.constant 0 : i32
    %c0_i32_0 = arith.constant 0 : i32
    %c0_i32_1 = arith.constant 0 : i32
    return %c0_i32, %c0_i32_0 : i32, i32
  }
  func.func @transform_5(%arg0: i32) -> (i32, i32) {
    %c0_i32 = arith.constant 0 : i32
    %c0_i32_0 = arith.constant 0 : i32
    %c0_i32_1 = arith.constant 0 : i32
    return %c0_i32, %c0_i32_0 : i32, i32
  }
  func.func @transform_6(%arg0: i32) -> (i32, i32) {
    %c0_i32 = arith.constant 0 : i32
    %c0_i32_0 = arith.constant 0 : i32
    %c0_i32_1 = arith.constant 0 : i32
    return %c0_i32, %c0_i32_0 : i32, i32
  }
  func.func @transform_7(%arg0: i32) -> (i32, i32) {
    %c0_i32 = arith.constant 0 : i32
    %c0_i32_0 = arith.constant 0 : i32
    return %c0_i32, %arg0 : i32, i32
  }
}

</mosaic_0001>

<llo_original>
// kernel: tpu_custom_call.1
$region0: #{tpu_custom_call.1}
  #allocation0 [shape = 'u32[]', space=smem, size = 0x4, offset = 0x4, fixed_abs, tag = 'smem constant byte address 0x4 - core index']
  #allocation1 [shape = 'u32[144,128]{1,0:T(1,128)}', space=vmem, size = 0x12000, scoped, tag = 'internal scratch']
  %s0 = inlined_call_operand.vmem [shape: bf16[16,128], index: 0, kind: input, shape index: {}]
  %s1 = inlined_call_operand.vmem [shape: bf16[32,16], index: 1, kind: input, shape index: {}]
  %s2 = inlined_call_operand.vmem [shape: f32[32,1], index: 2, kind: input, shape index: {}]
  %s3 = inlined_call_operand.vmem [shape: bf16[32,32], index: 3, kind: input, shape index: {}]
  %s4 = inlined_call_operand.vmem [shape: f32[32,1], index: 4, kind: input, shape index: {}]
  %s5 = inlined_call_operand.vmem [shape: bf16[8,32], index: 5, kind: input, shape index: {}]
  %s6 = inlined_call_operand.vmem [shape: f32[8,1], index: 6, kind: input, shape index: {}]
  %s7 = inlined_call_operand.hbm [shape: f32[8,128], index: 7, kind: output, shape index: {}]
  %s8 = sld [smem:[#allocation0]]
  $region38: #{tpu_custom_call.1} parent=0
    _
  %s10 = ssub.s32 1, %s8
  %s11 = scalar_select 0, %s10, %s8
  $region1: #{tpu_custom_call.1} parent=0
    #allocation2 [shape = 'u8[4096]{0}', space=vmem, size = 0x1000, scoped, tag = 'output window, operand 0, single buffered']
    #allocation3 [shape = 's32[1]{0}', space=sflag, size = 0x4, scoped, tag = 'scoped memory for tpu_custom_call.1']
    %12 = vsyncpa [#allocation3], 0
    // Predicated region
    $region2: #{tpu_custom_call.1} parent=1 // pred_check
      _
    $region3: #{tpu_custom_call.1} parent=1 // pred_check_branch
      %14 = sbr.rel (0) target = $region5
    $region4: #{tpu_custom_call.1} parent=1 // pred_region
      _
    $region5: #{tpu_custom_call.1} parent=1 // pred_fallthru
      _
    // Predicated region
    $region6: #{tpu_custom_call.1} parent=1 // pred_check
      _
    $region7: #{tpu_custom_call.1} parent=1 // pred_check_branch
      %16 = sbr.rel (0) target = $region9
    $region8: #{tpu_custom_call.1} parent=1 // pred_region
      _
    $region9: #{tpu_custom_call.1} parent=1 // pred_fallthru
      _
    // Predicated region
    $region10: #{tpu_custom_call.1} parent=1 // pred_check
      _
    $region11: #{tpu_custom_call.1} parent=1 // pred_check_branch
      %18 = sbr.rel (0) target = $region13
    $region12: #{tpu_custom_call.1} parent=1 // pred_region
      _
    $region13: #{tpu_custom_call.1} parent=1 // pred_fallthru
      _
    // Predicated region
    $region14: #{tpu_custom_call.1} parent=1 // pred_check
      _
    $region15: #{tpu_custom_call.1} parent=1 // pred_check_branch
      %20 = sbr.rel (0) target = $region17
    $region16: #{tpu_custom_call.1} parent=1 // pred_region
      _
    $region17: #{tpu_custom_call.1} parent=1 // pred_fallthru
      _
    // Predicated region
    $region18: #{tpu_custom_call.1} parent=1 // pred_check
      _
    $region19: #{tpu_custom_call.1} parent=1 // pred_check_branch
      %22 = sbr.rel (0) target = $region21
    $region20: #{tpu_custom_call.1} parent=1 // pred_region
      _
    $region21: #{tpu_custom_call.1} parent=1 // pred_fallthru
      _
    // Predicated region
    $region22: #{tpu_custom_call.1} parent=1 // pred_check
      _
    $region23: #{tpu_custom_call.1} parent=1 // pred_check_branch
      %24 = sbr.rel (0) target = $region25
    $region24: #{tpu_custom_call.1} parent=1 // pred_region
      _
    $region25: #{tpu_custom_call.1} parent=1 // pred_fallthru
      _
    // Predicated region
    $region26: #{tpu_custom_call.1} parent=1 // pred_check
      _
    $region27: #{tpu_custom_call.1} parent=1 // pred_check_branch
      %26 = sbr.rel (0) target = $region29
    $region28: #{tpu_custom_call.1} parent=1 // pred_region
      _
    $region29: #{tpu_custom_call.1} parent=1 // pred_fallthru
      _
    %v28 = vld [vmem:[%s1] sm:$0xf]
    %v29 = vld [vmem:[%s1 + $0x4] sm:$0xf]
    %v30 = vld [vmem:[%s1 + $0x8] sm:$0xf]
    %v31 = vld [vmem:[%s1 + $0xc] sm:$0xf]
    %v32 = vld [vmem:[%s0] sm:$0xf]
    %v33 = vld [vmem:[%s0 + $0x4] sm:$0xf]
    %v34 = vld [vmem:[%s2] sm:$0xff]
    %v35 = vld [vmem:[%s2 + $0x8] sm:$0xff]
    %v36 = vld [vmem:[%s2 + $0x10] sm:$0xff]
    %v37 = vld [vmem:[%s2 + $0x18] sm:$0xff]
    %39 = vset.pattern.permute.xlu0 0
    %40 = vperm.xlu0 %39, %v34
    %v41 = vpop.permute.xlu0 %40
    %44 = vset.pattern.permute.xlu0 0
    %45 = vperm.xlu0 %44, %v35
    %v46 = vpop.permute.xlu0 %45
    %49 = vset.pattern.permute.xlu0 0
    %50 = vperm.xlu0 %49, %v36
    %v51 = vpop.permute.xlu0 %50
    %54 = vset.pattern.permute.xlu0 0
    %55 = vperm.xlu0 %54, %v37
    %v56 = vpop.permute.xlu0 %55
    %v62 = vunpack.c.l.b16 %v28
    %v63 = vunpack.c.l.b16 %v29
    %v64 = vunpack.c.l.b16 %v30
    %v65 = vunpack.c.l.b16 %v31
    %v66 = vpack.c.b16 %v63, %v62
    %v67 = vpack.c.b16 %v65, %v64
    %v70 = vunpack.c.l.b16 %v32
    %v71 = vunpack.c.l.b16 %v33
    %v72 = vpack.c.b16 %v71, %v70
    %vm74 = vcmask 130048
    %v76 = vsel %vm74, %v66, 0
    %v79 = vsel %vm74, %v67, 0
    %81 = vmatprep.subr.bf16.mxu0 0
    %82 = vmatpush1.bf16.msra.mxu0 %v72
    %83 = vmatprep.subr.bf16.mxu0 0
    %84 = vmatpush1.bf16.msra.mxu0 0
    %85 = vmatprep.subr.bf16.mxu0 0
    %86 = vmatpush1.bf16.msra.mxu0 0
    %87 = vmatprep.subr.bf16.mxu0 0
    %88 = vmatpush1.bf16.msra.mxu0 0
    %89 = vmatprep.subr.bf16.mxu0 0
    %90 = vmatpush1.bf16.msra.mxu0 0
    %91 = vmatprep.subr.bf16.mxu0 0
    %92 = vmatpush1.bf16.msra.mxu0 0
    %93 = vmatprep.subr.bf16.mxu0 0
    %94 = vmatpush1.bf16.msra.mxu0 0
    %95 = vmatprep.subr.bf16.mxu0 0
    %96 = vmatpush1.bf16.msra.mxu0 0
    %97 = vmatprep.subr.bf16.mxu0 0
    %98 = vmatpush1.bf16.msra.mxu0 0
    %99 = vmatprep.subr.bf16.mxu0 0
    %100 = vmatpush1.bf16.msra.mxu0 0
    %101 = vmatprep.subr.bf16.mxu0 0
    %102 = vmatpush1.bf16.msra.mxu0 0
    %103 = vmatprep.subr.bf16.mxu0 0
    %104 = vmatpush1.bf16.msra.mxu0 0
    %105 = vmatprep.subr.bf16.mxu0 0
    %106 = vmatpush1.bf16.msra.mxu0 0
    %107 = vmatprep.subr.bf16.mxu0 0
    %108 = vmatpush1.bf16.msra.mxu0 0
    %109 = vmatprep.subr.bf16.mxu0 0
    %110 = vmatpush1.bf16.msra.mxu0 0
    %111 = vmatprep.subr.bf16.mxu0 0
    %112 = vmatpush1.bf16.msra.mxu0 0
    %113 = vmatprep.mubr.bf16.mxu0 0
    %114 = vmatmul.mubr.bf16.gmra.mrb[0].mxu0 %v76
    %v115 = vpop.f32.mrb[0].mxu0
    %v116 = vadd.f32 %v41, %v115
    %v117 = vpop.f32.mrb[0].mxu0
    %v118 = vpop.f32.mrb[0].mxu0
    %v119 = vadd.f32 %v46, %v118
    %v120 = vpop.f32.mrb[0].mxu0
    %121 = vmatprep.mubr.bf16.mxu0 0
    %122 = vmatmul.mubr.bf16.gmra.mrb[0].mxu0 %v79
    %v123 = vpop.f32.mrb[0].mxu0
    %v124 = vadd.f32 %v51, %v123
    %v125 = vpop.f32.mrb[0].mxu0
    %v126 = vpop.f32.mrb[0].mxu0
    %v127 = vadd.f32 %v56, %v126
    %v128 = vpop.f32.mrb[0].mxu0
    %129 = vdwg.mxu0
    %v130 = vmax.f32 %v116, 0.0
    %v131 = vmax.f32 %v119, 0.0
    %v132 = vmax.f32 %v124, 0.0
    %v133 = vmax.f32 %v127, 0.0
    %v134 = vld [vmem:[%s3] sm:$0xf]
    %v135 = vld [vmem:[%s3 + $0x4] sm:$0xf]
    %v136 = vld [vmem:[%s3 + $0x8] sm:$0xf]
    %v137 = vld [vmem:[%s3 + $0xc] sm:$0xf]
    %v138 = vpack.c.bf16 %v131, %v130
    %v139 = vpack.c.bf16 %v133, %v132
    %v140 = vld [vmem:[%s4] sm:$0xff]
    %v141 = vld [vmem:[%s4 + $0x8] sm:$0xff]
    %v142 = vld [vmem:[%s4 + $0x10] sm:$0xff]
    %v143 = vld [vmem:[%s4 + $0x18] sm:$0xff]
    %145 = vset.pattern.permute.xlu0 0
    %146 = vperm.xlu0 %145, %v140
    %v147 = vpop.permute.xlu0 %146
    %150 = vset.pattern.permute.xlu0 0
    %151 = vperm.xlu0 %150, %v141
    %v152 = vpop.permute.xlu0 %151
    %155 = vset.pattern.permute.xlu0 0
    %156 = vperm.xlu0 %155, %v142
    %v157 = vpop.permute.xlu0 %156
    %160 = vset.pattern.permute.xlu0 0
    %161 = vperm.xlu0 %160, %v143
    %v162 = vpop.permute.xlu0 %161
    %v168 = vunpack.c.l.b16 %v134
    %v169 = vunpack.c.l.b16 %v135
    %v170 = vunpack.c.l.b16 %v136
    %v171 = vunpack.c.l.b16 %v137
    %v172 = vpack.c.b16 %v169, %v168
    %v173 = vpack.c.b16 %v171, %v170
    %vm174 = vcmask 261120
    %v176 = vsel %vm174, %v172, 0
    %v179 = vsel %vm174, %v173, 0
    %181 = vmatprep.subr.bf16.mxu0 0
    %182 = vmatpush1.bf16.msra.mxu0 %v138
    %183 = vmatprep.subr.bf16.mxu0 0
    %184 = vmatpush1.bf16.msra.mxu0 %v139
    %185 = vmatprep.subr.bf16.mxu0 0
    %186 = vmatpush1.bf16.msra.mxu0 0
    %187 = vmatprep.subr.bf16.mxu0 0
    %188 = vmatpush1.bf16.msra.mxu0 0
    %189 = vmatprep.subr.bf16.mxu0 0
    %190 = vmatpush1.bf16.msra.mxu0 0
    %191 = vmatprep.subr.bf16.mxu0 0
    %192 = vmatpush1.bf16.msra.mxu0 0
    %193 = vmatprep.subr.bf16.mxu0 0
    %194 = vmatpush1.bf16.msra.mxu0 0
    %195 = vmatprep.subr.bf16.mxu0 0
    %196 = vmatpush1.bf16.msra.mxu0 0
    %197 = vmatprep.subr.bf16.mxu0 0
    %198 = vmatpush1.bf16.msra.mxu0 0
    %199 = vmatprep.subr.bf16.mxu0 0
    %200 = vmatpush1.bf16.msra.mxu0 0
    %201 = vmatprep.subr.bf16.mxu0 0
    %202 = vmatpush1.bf16.msra.mxu0 0
    %203 = vmatprep.subr.bf16.mxu0 0
    %204 = vmatpush1.bf16.msra.mxu0 0
    %205 = vmatprep.subr.bf16.mxu0 0
    %206 = vmatpush1.bf16.msra.mxu0 0
    %207 = vmatprep.subr.bf16.mxu0 0
    %208 = vmatpush1.bf16.msra.mxu0 0
    %209 = vmatprep.subr.bf16.mxu0 0
    %210 = vmatpush1.bf16.msra.mxu0 0
    %211 = vmatprep.subr.bf16.mxu0 0
    %212 = vmatpush1.bf16.msra.mxu0 0
    %213 = vmatprep.mubr.bf16.mxu0 0
    %214 = vmatmul.mubr.bf16.gmra.mrb[0].mxu0 %v176
    %v215 = vpop.f32.mrb[0].mxu0
    %v216 = vadd.f32 %v147, %v215
    %v217 = vpop.f32.mrb[0].mxu0
    %v218 = vpop.f32.mrb[0].mxu0
    %v219 = vadd.f32 %v152, %v218
    %v220 = vpop.f32.mrb[0].mxu0
    %221 = vmatprep.mubr.bf16.mxu0 0
    %222 = vmatmul.mubr.bf16.gmra.mrb[0].mxu0 %v179
    %v223 = vpop.f32.mrb[0].mxu0
    %v224 = vadd.f32 %v157, %v223
    %v225 = vpop.f32.mrb[0].mxu0
    %v226 = vpop.f32.mrb[0].mxu0
    %v227 = vadd.f32 %v162, %v226
    %v228 = vpop.f32.mrb[0].mxu0
    %229 = vdwg.mxu0
    %v230 = vmax.f32 %v216, 0.0
    %v231 = vmax.f32 %v219, 0.0
    %v232 = vmax.f32 %v224, 0.0
    %v233 = vmax.f32 %v227, 0.0
    %v234 = vld [vmem:[%s5] sm:$0xf]
    %v235 = vpack.c.bf16 %v231, %v230
    %v236 = vpack.c.bf16 %v233, %v232
    %v237 = vld [vmem:[%s6] sm:$0xff]
    %239 = vset.pattern.permute.xlu0 0
    %240 = vperm.xlu0 %239, %v237
    %v241 = vpop.permute.xlu0 %240
    %v244 = vsel %vm174, %v234, 0
    %246 = vmatprep.subr.bf16.mxu0 0
    %247 = vmatpush1.bf16.msra.mxu0 %v235
    %248 = vmatprep.subr.bf16.mxu0 0
    %249 = vmatpush1.bf16.msra.mxu0 %v236
    %250 = vmatprep.subr.bf16.mxu0 0
    %251 = vmatpush1.bf16.msra.mxu0 0
    %252 = vmatprep.subr.bf16.mxu0 0
    %253 = vmatpush1.bf16.msra.mxu0 0
    %254 = vmatprep.subr.bf16.mxu0 0
    %255 = vmatpush1.bf16.msra.mxu0 0
    %256 = vmatprep.subr.bf16.mxu0 0
    %257 = vmatpush1.bf16.msra.mxu0 0
    %258 = vmatprep.subr.bf16.mxu0 0
    %259 = vmatpush1.bf16.msra.mxu0 0
    %260 = vmatprep.subr.bf16.mxu0 0
    %261 = vmatpush1.bf16.msra.mxu0 0
    %262 = vmatprep.subr.bf16.mxu0 0
    %263 = vmatpush1.bf16.msra.mxu0 0
    %264 = vmatprep.subr.bf16.mxu0 0
    %265 = vmatpush1.bf16.msra.mxu0 0
    %266 = vmatprep.subr.bf16.mxu0 0
    %267 = vmatpush1.bf16.msra.mxu0 0
    %268 = vmatprep.subr.bf16.mxu0 0
    %269 = vmatpush1.bf16.msra.mxu0 0
    %270 = vmatprep.subr.bf16.mxu0 0
    %271 = vmatpush1.bf16.msra.mxu0 0
    %272 = vmatprep.subr.bf16.mxu0 0
    %273 = vmatpush1.bf16.msra.mxu0 0
    %274 = vmatprep.subr.bf16.mxu0 0
    %275 = vmatpush1.bf16.msra.mxu0 0
    %276 = vmatprep.subr.bf16.mxu0 0
    %277 = vmatpush1.bf16.msra.mxu0 0
    %278 = vmatprep.mubr.bf16.mxu0 0
    %279 = vmatmul.mubr.bf16.gmra.mrb[0].mxu0 %v244
    %v280 = vpop.f32.mrb[0].mxu0
    %v281 = vadd.f32 %v241, %v280
    %v282 = vpop.f32.mrb[0].mxu0
    %v283 = vpop.f32.mrb[0].mxu0
    %v284 = vpop.f32.mrb[0].mxu0
    %285 = vdwg.mxu0
    %v286 = vxor.u32 %v281, 2147483648
    %v287 = vmul.f32 %v286, 1.442695
    %v288 = vpow.pop %v287
    %v289 = vadd.f32 %v288, 1.0
    %v290 = vrcp.pop %v289
    %v291 = vmul.f32 1.0, %v290
    %292 = vst [vmem:[#allocation2] sm:$0xff] %v291
    // Predicated region
    $region30: #{tpu_custom_call.1} parent=1 // pred_check
      _
    $region31: #{tpu_custom_call.1} parent=1 // pred_check_branch
      %294 = sbr.rel (0) target = $region33
    $region32: #{tpu_custom_call.1} parent=1 // pred_region
      %s296 = ssub.s32 128, 128
      %297 = vsyncadd [#allocation3], %s296
      %s299 = sshll.u32 [#allocation2], 4
      %s300 = int_to_ptr.vmem [resolvable:$true] %s299
      %302 = dma.vmem_to_hbm [thread:$0]  %s300, 128, %s7, [#allocation3]
    $region33: #{tpu_custom_call.1} parent=1 // pred_fallthru
      _
    // Predicated region
    $region34: #{tpu_custom_call.1} parent=1 // pred_check
      _
    $region35: #{tpu_custom_call.1} parent=1 // pred_check_branch
      %304 = sbr.rel (0) target = $region37
    $region36: #{tpu_custom_call.1} parent=1 // pred_region
      %305 = dma.done [#allocation3], 128
    $region37: #{tpu_custom_call.1} parent=1 // pred_fallthru
      _
    %306 = vsyncpa [#allocation3], 1

</llo_original>
